<compile_context>
chip_gen: v6e
topology: v6e:2x2x1
jax: 0.10.0
libtpu: 0.0.40
codegen_flags: <defaults>
</compile_context>

<pallas_src>
import numpy as np
import jax
import jax.numpy as jnp
from jax.experimental import pallas as pl
from jax.experimental.pallas import tpu as pltpu

NUM_POINTS = 6        # num_points == 6 so the reference's broadcast/assignments are shape-consistent
N_FEAT = 8
HIDDEN = 32
N_NODES = 2 * NUM_POINTS
N_PAD = 16            # pad node dimension to a sublane-friendly size
TB = 8                # samples packed per GNN grid step -> 128-row block-diagonal adjacency
GROUP_N = TB * N_PAD  # 128
TILE_R_MAX = 256      # max softargmax row tile (fills the 256-row MXU on v6e/v7x)


def _round_up(x, m):
    return ((x + m - 1) // m) * m


# --------------------------- Pallas kernel 1: batched softargmax2d ---------------------------

def _softargmax_kernel(x_ref, coords_ref, out_ref):
    # x_ref      : [tile_r, HW]  flattened heatmaps (f32)
    # coords_ref : [HW, 128]     bf16; col 0 = (h-1)*row_grid, col 1 = (w-1)*col_grid, rest 0
    # out_ref    : [tile_r, 128] lane-dense output; cols 0/1 hold (row, col)
    beta = 100.0
    x = x_ref[...] * beta
    m = jnp.max(x, axis=-1, keepdims=True)
    e = jnp.exp(x - m)                                    # f32 unnormalized softmax numerator
    denom = jnp.sum(e, axis=-1, keepdims=True)            # f32 [tile_r, 1]
    # Normalization commutes with the linear coordinate reduction: do the MXU
    # matmul on the unnormalized (bf16) numerator and scale the tiny result.
    acc = jnp.dot(e.astype(jnp.bfloat16), coords_ref[...],
                  preferred_element_type=jnp.float32)     # [tile_r, 128] on the MXU
    out_ref[...] = acc * pl.reciprocal(denom, approx=True)   # one scale per output, EUP recip


def softargmax2d_batched(heatmaps):
    """heatmaps: [M, C, H, W] -> points [M, C, 2] = (row, col) per channel."""
    M, C, H, W = heatmaps.shape
    HW = H * W
    R = M * C
    tile_r = min(TILE_R_MAX, _round_up(R, 8))     # whole slab in one block when R is small
    R_pad = _round_up(R, tile_r)

    x = jnp.zeros((R_pad, HW), jnp.float32).at[:R].set(
        heatmaps.reshape(R, HW).astype(jnp.float32))

    ic_np, ir_np = np.meshgrid(np.linspace(0, 1, W), np.linspace(0, 1, H), indexing="xy")
    coords = np.zeros((HW, 128), np.float32)
    coords[:, 0] = ((H - 1) * ir_np.reshape(HW)).astype(np.float32)
    coords[:, 1] = ((W - 1) * ic_np.reshape(HW)).astype(np.float32)
    # bf16 MXU operand; coordinate values are small integers here (exact in bf16).
    coords_bf16 = jnp.asarray(coords, dtype=jnp.bfloat16)

    out = pl.pallas_call(
        _softargmax_kernel,
        out_shape=jax.ShapeDtypeStruct((R_pad, 128), jnp.float32),
        grid=(R_pad // tile_r,),
        in_specs=[
            pl.BlockSpec((tile_r, HW), lambda i: (i, 0)),
            pl.BlockSpec((HW, 128), lambda i: (0, 0)),     # constant index -> DMA'd once, resident
        ],
        out_specs=pl.BlockSpec((tile_r, 128), lambda i: (i, 0)),
        compiler_params=pltpu.CompilerParams(dimension_semantics=("parallel",)),
    )(x, coords_bf16)
    return out[:R, :2].reshape(M, C, 2)


# --------------------------- Pallas kernel 2: batched synthetic GraphNet ---------------------------
# TODO(synk): the reference's GraphNet architecture is external/unspecified; synthesized here as a
# deterministic 2-layer dense GCN with masked mean pooling and a sigmoid head.

def _gnn_kernel(a_ref, xw1_ref, b1_ref, w2_ref, b2_ref, mw3_ref, pool_ref, b3_ref, out_ref):
    # a_ref   : [GROUP_N, GROUP_N] block-diagonal normalized adjacency (TB samples per step)
    # xw1_ref : [GROUP_N, HIDDEN]  per-group node features after the hoisted X @ W1
    # mw3_ref : [GROUP_N, HIDDEN]  folded (mean-pool mask * w3), tiled per sample block
    # pool_ref: [TB, GROUP_N]      per-sample segment-sum matrix (block indicator)
    # out_ref : [TB, 128]          col 0 holds each sample's prediction
    a = a_ref[...]
    # layer 1: relu(A @ (X @ W1) + b1)   (X @ W1 hoisted to wrapper — associativity)
    h = jnp.maximum(jnp.dot(a, xw1_ref[...], preferred_element_type=jnp.float32) + b1_ref[...], 0.0)
    # layer 2: relu((A @ h) @ W2 + b2)
    h = jnp.dot(a, h, preferred_element_type=jnp.float32)
    h = jnp.maximum(jnp.dot(h, w2_ref[...], preferred_element_type=jnp.float32) + b2_ref[...], 0.0)
    # folded masked-mean-pool + linear head: per-sample sum(h * (mask * w3)) + b3
    hw = h * mw3_ref[...]                                             # [GROUP_N, HIDDEN]
    pooled = jnp.dot(pool_ref[...], hw, preferred_element_type=jnp.float32)   # [TB, HIDDEN] segment sums
    logit = jnp.sum(pooled, axis=1, keepdims=True) + b3_ref[...]      # [TB, 1]
    pred = 1.0 / (1.0 + jnp.exp(-logit))                              # sigmoid
    out_ref[...] = jnp.broadcast_to(pred, (TB, 128))                  # one lane-dense store per group


def gnn_pallas_batched(node_x, params):
    """node_x: [B, N_NODES, 8] -> predictions [B] in (0, 1)."""
    B = node_x.shape[0]
    G = -(-B // TB)                     # number of groups == grid steps
    B_pad = G * TB
    xp = jnp.zeros((B_pad, N_PAD, N_FEAT), jnp.float32).at[:B, :N_NODES].set(node_x)
    # hoisted first GCN matmul: one batched [B_pad*N_PAD, 8] @ [8, HIDDEN], then packed per group
    xw1 = jnp.einsum("bnf,fh->bnh", xp, params["w1"]).astype(jnp.float32)
    xw1 = xw1.reshape(B_pad * N_PAD, HIDDEN)

    out = pl.pallas_call(
        _gnn_kernel,
        out_shape=jax.ShapeDtypeStruct((B_pad, 128), jnp.float32),
        grid=(G,),
        in_specs=[
            pl.BlockSpec((GROUP_N, GROUP_N), lambda g: (0, 0)),  # block-diag Â, resident across grid
            pl.BlockSpec((GROUP_N, HIDDEN), lambda g: (g, 0)),   # per-group packed node features
            pl.BlockSpec((1, HIDDEN), lambda g: (0, 0)),
            pl.BlockSpec((HIDDEN, HIDDEN), lambda g: (0, 0)),
            pl.BlockSpec((1, HIDDEN), lambda g: (0, 0)),
            pl.BlockSpec((GROUP_N, HIDDEN), lambda g: (0, 0)),
            pl.BlockSpec((TB, GROUP_N), lambda g: (0, 0)),
            pl.BlockSpec((1, 1), lambda g: (0, 0)),
        ],
        out_specs=pl.BlockSpec((TB, 128), lambda g: (g, 0)),
        compiler_params=pltpu.CompilerParams(dimension_semantics=("parallel",)),
    )(params["a_blk"], xw1, params["b1"], params["w2"], params["b2"],
      params["mw3_rep"], params["pool"], params["b3"])
    return out[:B, 0]                                               # [B]


# --------------------------- graph feature construction (glue, plain JAX) ---------------------------

def read_edge_index(num_points):
    # TODO(synk): read_edge_index is undefined in the reference; use a deterministic ring graph.
    src = np.arange(num_points)
    dst = (src + 1) % num_points
    return np.concatenate([np.stack([src, dst], 1), np.stack([dst, src], 1)], 0)  # [E, 2]


def angles_for_points(coords):
    """coords: [2, NUM_POINTS]; ring graph -> each point has neighbors (p+1, p-1) -> one angle."""
    N = NUM_POINTS
    idx = np.arange(N)
    n1 = (idx + 1) % N
    n2 = (idx - 1) % N
    p0 = coords                      # [2, N]
    q1 = coords[:, n1]
    q2 = coords[:, n2]
    v1 = q1 - p0
    v2 = q2 - p0
    dot = jnp.sum(v1 * v2, axis=0)
    nrm1 = jnp.sqrt(jnp.sum(v1 * v1, axis=0))
    nrm2 = jnp.sqrt(jnp.sum(v2 * v2, axis=0))
    cosv = dot / (nrm1 * nrm2)
    ang = jnp.arccos(jnp.clip(cosv, -1.0, 1.0)) * (180.0 / np.pi)   # clamp to [-1, 1] before acos
    ang = jnp.where(jnp.isnan(cosv), 0.0, ang)                      # reference's NaN guard
    max1, min1 = jnp.max(q1, axis=0), jnp.min(q1, axis=0)
    max2, min2 = jnp.max(q2, axis=0), jnp.min(q2, axis=0)
    angle = ang
    angle = jnp.where((max1 == 0) & (max2 == 0), -1.0, angle)
    angle = jnp.where((max2 == 0) & (min1 > 0), 0.0, angle)
    angle = jnp.where((max1 == 0) & (min2 > 0), 0.0, angle)
    angle = jnp.where(jnp.min(p0, axis=0) > 0, angle, -2.0)
    return angle.reshape(N, 1)       # [N, 1]


def build_node_features(points1, points2):
    """points1/points2: [B, NUM_POINTS, 2] -> node features [B, 2*NUM_POINTS, 8]."""
    B = points1.shape[0]
    N = NUM_POINTS
    x = jnp.ones((B, 8, 2 * N), jnp.float32)
    x = x.at[:, 0:2, 0:N].set(jnp.swapaxes(points1, 1, 2))
    x = x.at[:, 0:2, N:].set(jnp.swapaxes(points2, 1, 2))
    a1 = jax.vmap(angles_for_points)(x[:, 0:2, 0:N])   # [B, N, 1]
    a2 = jax.vmap(angles_for_points)(x[:, 0:2, N:])
    # matches torch broadcast: x[2:, :N] = angles ([N,1] -> [6,N] block, N == 6)
    x = x.at[:, 2:, 0:N].set(jnp.broadcast_to(a1, (B, 6, N)))
    x = x.at[:, 2:, N:].set(jnp.broadcast_to(a2, (B, 6, N)))
    return jnp.swapaxes(x, 1, 2)                       # data.x = x.t() -> [B, 2N, 8]


@jax.jit
def graph_contrastive_loss(p1, p2, params):
    B = p1.shape[0]
    # one kernel launch for all 2*B*C soft-argmaxes
    pts = softargmax2d_batched(jnp.concatenate([p1, p2], axis=0))   # [2B, C, 2]
    points1, points2 = pts[:B], pts[B:]
    node_x = build_node_features(points1, points2)                  # [B, 2N, 8]
    pred = gnn_pallas_batched(node_x, params)                       # [B], one launch
    return jnp.mean(1.0 - pred)


# --------------------------- deterministic parameter construction ---------------------------

def make_params():
    edge = read_edge_index(NUM_POINTS)
    A = np.zeros((N_NODES, N_NODES), np.float32)
    A[edge[:, 0], edge[:, 1]] = 1.0
    A = A + np.eye(N_NODES, dtype=np.float32)                  # self-loops
    dinv = 1.0 / np.sqrt(A.sum(1))
    A_hat = (A * dinv[:, None]) * dinv[None, :]                # D^-1/2 (A+I) D^-1/2
    A_pad = np.zeros((N_PAD, N_PAD), np.float32)
    A_pad[:N_NODES, :N_NODES] = A_hat
    # block-diagonal adjacency packing TB samples per grid step -> [128, 128]
    A_blk = np.kron(np.eye(TB, dtype=np.float32), A_pad)
    mask = np.zeros((N_PAD, 1), np.float32)
    mask[:N_NODES, 0] = 1.0 / N_NODES                          # mean-pool weights over real nodes
    # per-sample segment-sum (block-indicator) pooling matrix: [TB, 128]
    pool = np.kron(np.eye(TB, dtype=np.float32), np.ones((1, N_PAD), np.float32))

    kw1, kw2, kw3 = jax.random.split(jax.random.PRNGKey(42), 3)
    w1 = 0.1 * jax.random.normal(kw1, (N_FEAT, HIDDEN), jnp.float32)
    w2 = 0.1 * jax.random.normal(kw2, (HIDDEN, HIDDEN), jnp.float32)
    w3 = 0.1 * jax.random.normal(kw3, (1, HIDDEN), jnp.float32)
    mw3 = jnp.asarray(mask) * w3                               # folded pooling + head: [N_PAD, HIDDEN]
    mw3_rep = jnp.tile(mw3, (TB, 1))                           # tiled per sample block: [128, HIDDEN]
    return dict(
        a_blk=jnp.asarray(A_blk),
        w1=w1,
        b1=jnp.zeros((1, HIDDEN), jnp.float32),
        w2=w2,
        b2=jnp.zeros((1, HIDDEN), jnp.float32),
        mw3_rep=mw3_rep,
        pool=jnp.asarray(pool),
        b3=jnp.zeros((1, 1), jnp.float32),
    )


if __name__ == "__main__":
    B, C, H, W = 2, NUM_POINTS, 16, 16
    k1, k2 = jax.random.split(jax.random.PRNGKey(0))
    p1 = jax.random.uniform(k1, (B, C, H, W), jnp.float32)
    p2 = jax.random.uniform(k2, (B, C, H, W), jnp.float32)

    params = make_params()
    loss = graph_contrastive_loss(p1, p2, params)
    jax.block_until_ready(loss)
    assert loss.shape == () and bool(jnp.isfinite(loss))
    print("KERNEL_OK")
</pallas_src>

<mosaic_0001>
module attributes {stable_mosaic.version = 11 : i64} {
  func.func @_softargmax_kernel(%arg0: i32, %arg1: memref<24x256xf32, #tpu.memory_space<vmem>>, %arg2: memref<256x128xbf16, #tpu.memory_space<vmem>>, %arg3: memref<24x128xf32, #tpu.memory_space<vmem>>) attributes {dimension_semantics = [#tpu.dimension_semantics<parallel>], iteration_bounds = array<i64: 1>, scalar_prefetch = 0 : i64, scratch_operands = 0 : i64, tpu.core_type = #tpu.core_type<tc>, window_params = [{transform_indices = @transform_0, window_bounds = array<i64: 24, 256>}, {pipeline_mode = #tpu.pipeline_mode<synchronous>, transform_indices = @transform_1, window_bounds = array<i64: 256, 128>}, {transform_indices = @transform_2, window_bounds = array<i64: 24, 128>}]} {
    %c0 = arith.constant 0 : index
    %c0_0 = arith.constant 0 : index
    %0 = vector.load %arg1[%c0, %c0_0] : memref<24x256xf32, #tpu.memory_space<vmem>>, vector<24x256xf32>
    %cst = arith.constant 1.000000e+02 : f32
    %1 = vector.broadcast %cst : f32 to vector<24x256xf32>
    %2 = arith.mulf %0, %1 : vector<24x256xf32>
    %cst_1 = arith.constant dense<0xFF800000> : vector<24xf32>
    %3 = vector.multi_reduction <maximumf>, %2, %cst_1 [1] : vector<24x256xf32> to vector<24xf32>
    %4 = vector.shape_cast %3 : vector<24xf32> to vector<24x1xf32>
    %5 = vector.broadcast %4 : vector<24x1xf32> to vector<24x256xf32>
    %6 = arith.subf %2, %5 : vector<24x256xf32>
    %7 = math.exp %6 : vector<24x256xf32>
    %cst_2 = arith.constant dense<0.000000e+00> : vector<24xf32>
    %8 = vector.multi_reduction <add>, %7, %cst_2 [1] : vector<24x256xf32> to vector<24xf32>
    %9 = vector.shape_cast %8 : vector<24xf32> to vector<24x1xf32>
    %10 = arith.truncf %7 : vector<24x256xf32> to vector<24x256xbf16>
    %c0_3 = arith.constant 0 : index
    %c0_4 = arith.constant 0 : index
    %11 = vector.load %arg2[%c0_3, %c0_4] : memref<256x128xbf16, #tpu.memory_space<vmem>>, vector<256x128xbf16>
    %cst_5 = arith.constant dense<0.000000e+00> : vector<24x128xf32>
    %12 = tpu.matmul %10, %11, %cst_5 {dimension_numbers = #tpu.dot_dimension_numbers<[1], [0], [0], [1], [0, 0, 1, 1], [], []>} : vector<24x256xbf16>, vector<256x128xbf16>, vector<24x128xf32> -> vector<24x128xf32>
    %13 = tpu.reciprocal %9 {approx = true} : vector<24x1xf32> -> vector<24x1xf32>
    %14 = vector.broadcast %13 : vector<24x1xf32> to vector<24x128xf32>
    %15 = arith.mulf %12, %14 : vector<24x128xf32>
    %c0_6 = arith.constant 0 : index
    %c0_7 = arith.constant 0 : index
    %16 = vector.load %arg3[%c0_6, %c0_7] : memref<24x128xf32, #tpu.memory_space<vmem>>, vector<24x128xf32>
    tpu.vector_store %arg3[%c0_6, %c0_7], %15 {strides = array<i32>} : memref<24x128xf32, #tpu.memory_space<vmem>>, vector<24x128xf32>,
    return
  }
  func.func @transform_0(%arg0: i32) -> (i32, i32) {
    %c0_i32 = arith.constant 0 : i32
    %c0_i32_0 = arith.constant 0 : i32
    return %arg0, %c0_i32 : i32, i32
  }
  func.func @transform_1(%arg0: i32) -> (i32, i32) {
    %c0_i32 = arith.constant 0 : i32
    %c0_i32_0 = arith.constant 0 : i32
    %c0_i32_1 = arith.constant 0 : i32
    return %c0_i32, %c0_i32_0 : i32, i32
  }
  func.func @transform_2(%arg0: i32) -> (i32, i32) {
    %c0_i32 = arith.constant 0 : i32
    %c0_i32_0 = arith.constant 0 : i32
    return %arg0, %c0_i32 : i32, i32
  }
}

module attributes {stable_mosaic.version = 11 : i64} {
  func.func @_gnn_kernel(%arg0: i32, %arg1: memref<128x128xf32, #tpu.memory_space<vmem>>, %arg2: memref<128x32xf32, #tpu.memory_space<vmem>>, %arg3: memref<1x32xf32, #tpu.memory_space<vmem>>, %arg4: memref<32x32xf32, #tpu.memory_space<vmem>>, %arg5: memref<1x32xf32, #tpu.memory_space<vmem>>, %arg6: memref<128x32xf32, #tpu.memory_space<vmem>>, %arg7: memref<8x128xf32, #tpu.memory_space<vmem>>, %arg8: memref<1x1xf32, #tpu.memory_space<vmem>>, %arg9: memref<8x128xf32, #tpu.memory_space<vmem>>) attributes {dimension_semantics = [#tpu.dimension_semantics<parallel>], iteration_bounds = array<i64: 1>, scalar_prefetch = 0 : i64, scratch_operands = 0 : i64, tpu.core_type = #tpu.core_type<tc>, window_params = [{pipeline_mode = #tpu.pipeline_mode<synchronous>, transform_indices = @transform_0, window_bounds = array<i64: 128, 128>}, {transform_indices = @transform_1, window_bounds = array<i64: 128, 32>}, {pipeline_mode = #tpu.pipeline_mode<synchronous>, transform_indices = @transform_2, window_bounds = array<i64: 1, 32>}, {pipeline_mode = #tpu.pipeline_mode<synchronous>, transform_indices = @transform_3, window_bounds = array<i64: 32, 32>}, {pipeline_mode = #tpu.pipeline_mode<synchronous>, transform_indices = @transform_4, window_bounds = array<i64: 1, 32>}, {pipeline_mode = #tpu.pipeline_mode<synchronous>, transform_indices = @transform_5, window_bounds = array<i64: 128, 32>}, {pipeline_mode = #tpu.pipeline_mode<synchronous>, transform_indices = @transform_6, window_bounds = array<i64: 8, 128>}, {pipeline_mode = #tpu.pipeline_mode<synchronous>, transform_indices = @transform_7, window_bounds = array<i64: 1, 1>}, {transform_indices = @transform_8, window_bounds = array<i64: 8, 128>}]} {
    %c0 = arith.constant 0 : index
    %c0_0 = arith.constant 0 : index
    %0 = vector.load %arg1[%c0, %c0_0] : memref<128x128xf32, #tpu.memory_space<vmem>>, vector<128x128xf32>
    %c0_1 = arith.constant 0 : index
    %c0_2 = arith.constant 0 : index
    %1 = vector.load %arg2[%c0_1, %c0_2] : memref<128x32xf32, #tpu.memory_space<vmem>>, vector<128x32xf32>
    %cst = arith.constant dense<0.000000e+00> : vector<128x32xf32>
    %2 = tpu.matmul %0, %1, %cst {dimension_numbers = #tpu.dot_dimension_numbers<[1], [0], [0], [1], [0, 0, 1, 1], [], []>} : vector<128x128xf32>, vector<128x32xf32>, vector<128x32xf32> -> vector<128x32xf32>
    %c0_3 = arith.constant 0 : index
    %c0_4 = arith.constant 0 : index
    %3 = vector.load %arg3[%c0_3, %c0_4] : memref<1x32xf32, #tpu.memory_space<vmem>>, vector<1x32xf32>
    %4 = vector.broadcast %3 : vector<1x32xf32> to vector<128x32xf32>
    %5 = arith.addf %2, %4 : vector<128x32xf32>
    %cst_5 = arith.constant 0.000000e+00 : f32
    %6 = vector.broadcast %cst_5 : f32 to vector<128x32xf32>
    %7 = arith.maximumf %5, %6 : vector<128x32xf32>
    %cst_6 = arith.constant dense<0.000000e+00> : vector<128x32xf32>
    %8 = tpu.matmul %0, %7, %cst_6 {dimension_numbers = #tpu.dot_dimension_numbers<[1], [0], [0], [1], [0, 0, 1, 1], [], []>} : vector<128x128xf32>, vector<128x32xf32>, vector<128x32xf32> -> vector<128x32xf32>
    %c0_7 = arith.constant 0 : index
    %c0_8 = arith.constant 0 : index
    %9 = vector.load %arg4[%c0_7, %c0_8] : memref<32x32xf32, #tpu.memory_space<vmem>>, vector<32x32xf32>
    %cst_9 = arith.constant dense<0.000000e+00> : vector<128x32xf32>
    %10 = tpu.matmul %8, %9, %cst_9 {dimension_numbers = #tpu.dot_dimension_numbers<[1], [0], [0], [1], [0, 0, 1, 1], [], []>} : vector<128x32xf32>, vector<32x32xf32>, vector<128x32xf32> -> vector<128x32xf32>
    %c0_10 = arith.constant 0 : index
    %c0_11 = arith.constant 0 : index
    %11 = vector.load %arg5[%c0_10, %c0_11] : memref<1x32xf32, #tpu.memory_space<vmem>>, vector<1x32xf32>
    %12 = vector.broadcast %11 : vector<1x32xf32> to vector<128x32xf32>
    %13 = arith.addf %10, %12 : vector<128x32xf32>
    %cst_12 = arith.constant 0.000000e+00 : f32
    %14 = vector.broadcast %cst_12 : f32 to vector<128x32xf32>
    %15 = arith.maximumf %13, %14 : vector<128x32xf32>
    %c0_13 = arith.constant 0 : index
    %c0_14 = arith.constant 0 : index
    %16 = vector.load %arg6[%c0_13, %c0_14] : memref<128x32xf32, #tpu.memory_space<vmem>>, vector<128x32xf32>
    %17 = arith.mulf %15, %16 : vector<128x32xf32>
    %c0_15 = arith.constant 0 : index
    %c0_16 = arith.constant 0 : index
    %18 = vector.load %arg7[%c0_15, %c0_16] : memref<8x128xf32, #tpu.memory_space<vmem>>, vector<8x128xf32>
    %cst_17 = arith.constant dense<0.000000e+00> : vector<8x32xf32>
    %19 = tpu.matmul %18, %17, %cst_17 {dimension_numbers = #tpu.dot_dimension_numbers<[1], [0], [0], [1], [0, 0, 1, 1], [], []>} : vector<8x128xf32>, vector<128x32xf32>, vector<8x32xf32> -> vector<8x32xf32>
    %cst_18 = arith.constant dense<0.000000e+00> : vector<8xf32>
    %20 = vector.multi_reduction <add>, %19, %cst_18 [1] : vector<8x32xf32> to vector<8xf32>
    %21 = vector.shape_cast %20 : vector<8xf32> to vector<8x1xf32>
    %c0_19 = arith.constant 0 : index
    %c0_20 = arith.constant 0 : index
    %22 = vector.load %arg8[%c0_19, %c0_20] : memref<1x1xf32, #tpu.memory_space<vmem>>, vector<1x1xf32>
    %23 = vector.broadcast %22 : vector<1x1xf32> to vector<8x1xf32>
    %24 = arith.addf %21, %23 : vector<8x1xf32>
    %cst_21 = arith.constant 0.000000e+00 : f32
    %25 = vector.broadcast %cst_21 : f32 to vector<8x1xf32>
    %26 = arith.subf %25, %24 : vector<8x1xf32>
    %27 = math.exp %26 : vector<8x1xf32>
    %cst_22 = arith.constant 1.000000e+00 : f32
    %28 = vector.broadcast %cst_22 : f32 to vector<8x1xf32>
    %29 = arith.addf %28, %27 : vector<8x1xf32>
    %cst_23 = arith.constant 1.000000e+00 : f32
    %30 = vector.broadcast %cst_23 : f32 to vector<8x1xf32>
    %31 = arith.divf %30, %29 : vector<8x1xf32>
    %32 = vector.shape_cast %31 : vector<8x1xf32> to vector<8x1xf32>
    %33 = vector.broadcast %32 : vector<8x1xf32> to vector<8x128xf32>
    %c0_24 = arith.constant 0 : index
    %c0_25 = arith.constant 0 : index
    %34 = vector.load %arg9[%c0_24, %c0_25] : memref<8x128xf32, #tpu.memory_space<vmem>>, vector<8x128xf32>
    tpu.vector_store %arg9[%c0_24, %c0_25], %33 {strides = array<i32>} : memref<8x128xf32, #tpu.memory_space<vmem>>, vector<8x128xf32>,
    return
  }
  func.func @transform_0(%arg0: i32) -> (i32, i32) {
    %c0_i32 = arith.constant 0 : i32
    %c0_i32_0 = arith.constant 0 : i32
    %c0_i32_1 = arith.constant 0 : i32
    return %c0_i32, %c0_i32_0 : i32, i32
  }
  func.func @transform_1(%arg0: i32) -> (i32, i32) {
    %c0_i32 = arith.constant 0 : i32
    %c0_i32_0 = arith.constant 0 : i32
    return %arg0, %c0_i32 : i32, i32
  }
  func.func @transform_2(%arg0: i32) -> (i32, i32) {
    %c0_i32 = arith.constant 0 : i32
    %c0_i32_0 = arith.constant 0 : i32
    %c0_i32_1 = arith.constant 0 : i32
    return %c0_i32, %c0_i32_0 : i32, i32
  }
  func.func @transform_3(%arg0: i32) -> (i32, i32) {
    %c0_i32 = arith.constant 0 : i32
    %c0_i32_0 = arith.constant 0 : i32
    %c0_i32_1 = arith.constant 0 : i32
    return %c0_i32, %c0_i32_0 : i32, i32
  }
  func.func @transform_4(%arg0: i32) -> (i32, i32) {
    %c0_i32 = arith.constant 0 : i32
    %c0_i32_0 = arith.constant 0 : i32
    %c0_i32_1 = arith.constant 0 : i32
    return %c0_i32, %c0_i32_0 : i32, i32
  }
  func.func @transform_5(%arg0: i32) -> (i32, i32) {
    %c0_i32 = arith.constant 0 : i32
    %c0_i32_0 = arith.constant 0 : i32
    %c0_i32_1 = arith.constant 0 : i32
    return %c0_i32, %c0_i32_0 : i32, i32
  }
  func.func @transform_6(%arg0: i32) -> (i32, i32) {
    %c0_i32 = arith.constant 0 : i32
    %c0_i32_0 = arith.constant 0 : i32
    %c0_i32_1 = arith.constant 0 : i32
    return %c0_i32, %c0_i32_0 : i32, i32
  }
  func.func @transform_7(%arg0: i32) -> (i32, i32) {
    %c0_i32 = arith.constant 0 : i32
    %c0_i32_0 = arith.constant 0 : i32
    %c0_i32_1 = arith.constant 0 : i32
    return %c0_i32, %c0_i32_0 : i32, i32
  }
  func.func @transform_8(%arg0: i32) -> (i32, i32) {
    %c0_i32 = arith.constant 0 : i32
    %c0_i32_0 = arith.constant 0 : i32
    return %arg0, %c0_i32 : i32, i32
  }
}

</mosaic_0001>

<llo_original>
// kernel: graph_contrastive_loss.2
$region0: #{graph_contrastive_loss.2}
  #allocation0 [shape = 'u32[]', space=smem, size = 0x4, offset = 0x4, fixed_abs, tag = 'smem constant byte address 0x4 - core index']
  #allocation1 [shape = 'u32[144,128]{1,0:T(1,128)}', space=vmem, size = 0x12000, scoped, tag = 'internal scratch']
  %s0 = inlined_call_operand.vmem [shape: f32[24,256], index: 0, kind: input, shape index: {}]
  %s1 = inlined_call_operand.vmem [shape: bf16[256,128], index: 1, kind: input, shape index: {}]
  %s2 = inlined_call_operand.vmem [shape: f32[24,128], index: 2, kind: output, shape index: {}]
  %s3 = sld [smem:[#allocation0]]
  $region18: #{graph_contrastive_loss.2} parent=0
    _
  %s5 = ssub.s32 1, %s3
  %s6 = scalar_select 0, %s5, %s3
  // Predicated region
  $region2: #{graph_contrastive_loss.2} parent=0 // pred_check
    _
  $region3: #{graph_contrastive_loss.2} parent=0 // pred_check_branch
    %8 = sbr.rel (0) target = $region5
  $region4: #{graph_contrastive_loss.2} parent=0 // pred_region
    _
  $region5: #{graph_contrastive_loss.2} parent=0 // pred_fallthru
    _
  // Predicated region
  $region6: #{graph_contrastive_loss.2} parent=0 // pred_check
    _
  $region7: #{graph_contrastive_loss.2} parent=0 // pred_check_branch
    %10 = sbr.rel (0) target = $region9
  $region8: #{graph_contrastive_loss.2} parent=0 // pred_region
    _
  $region9: #{graph_contrastive_loss.2} parent=0 // pred_fallthru
    _
  %v12 = vld [vmem:[%s0] sm:$0xff]
  %v13 = vld [vmem:[%s0 + $0x8] sm:$0xff]
  %v14 = vld [vmem:[%s0 + $0x10] sm:$0xff]
  %v15 = vld [vmem:[%s0 + $0x18] sm:$0xff]
  %v16 = vld [vmem:[%s0 + $0x20] sm:$0xff]
  %v17 = vld [vmem:[%s0 + $0x28] sm:$0xff]
  %v18 = vmul.f32 %v12, 100.0
  %v19 = vmul.f32 %v13, 100.0
  %v20 = vmul.f32 %v14, 100.0
  %v21 = vmul.f32 %v15, 100.0
  %v22 = vmul.f32 %v16, 100.0
  %v23 = vmul.f32 %v17, 100.0
  %v24 = vmax.f32 %v18, %v19
  %25 = vmax.xlane.f32.xlu0 %v24
  %v26 = vpop.xlane.xlu0 %25
  %v27 = vmax.f32 %v20, %v21
  %28 = vmax.xlane.f32.xlu0 %v27
  %v29 = vpop.xlane.xlu0 %28
  %v30 = vmax.f32 %v22, %v23
  %31 = vmax.xlane.f32.xlu0 %v30
  %v32 = vpop.xlane.xlu0 %31
  %v33 = vsub.f32 %v18, %v26
  %v34 = vsub.f32 %v19, %v26
  %v35 = vsub.f32 %v20, %v29
  %v36 = vsub.f32 %v21, %v29
  %v37 = vsub.f32 %v22, %v32
  %v38 = vsub.f32 %v23, %v32
  %v39 = vmul.f32 %v33, 1.442695
  %v40 = vpow.pop %v39
  %v41 = vmul.f32 %v34, 1.442695
  %v42 = vpow.pop %v41
  %v43 = vmul.f32 %v35, 1.442695
  %v44 = vpow.pop %v43
  %v45 = vmul.f32 %v36, 1.442695
  %v46 = vpow.pop %v45
  %v47 = vmul.f32 %v37, 1.442695
  %v48 = vpow.pop %v47
  %v49 = vmul.f32 %v38, 1.442695
  %v50 = vpow.pop %v49
  %v51 = vadd.f32 %v40, %v42
  %52 = vadd.xlane.f32.xlu0 %v51
  %v53 = vpop.xlane.xlu0 %52
  %v54 = vadd.f32 %v44, %v46
  %55 = vadd.xlane.f32.xlu0 %v54
  %v56 = vpop.xlane.xlu0 %55
  %v57 = vadd.f32 %v48, %v50
  %58 = vadd.xlane.f32.xlu0 %v57
  %v59 = vpop.xlane.xlu0 %58
  %v60 = vpack.c.bf16 %v44, %v40
  %v61 = vpack.c.bf16 %v46, %v42
  %v62 = vpack.c.bf16 %v48, %v48
  %v63 = vpack.c.bf16 %v50, %v50
  %v64 = vld [vmem:[%s1] sm:$0xf]
  %v65 = vld [vmem:[%s1 + $0x4] sm:$0xf]
  %v66 = vld [vmem:[%s1 + $0x8] sm:$0xf]
  %v67 = vld [vmem:[%s1 + $0xc] sm:$0xf]
  %v68 = vld [vmem:[%s1 + $0x10] sm:$0xf]
  %v69 = vld [vmem:[%s1 + $0x14] sm:$0xf]
  %v70 = vld [vmem:[%s1 + $0x18] sm:$0xf]
  %v71 = vld [vmem:[%s1 + $0x1c] sm:$0xf]
  %v72 = vld [vmem:[%s1 + $0x20] sm:$0xf]
  %v73 = vld [vmem:[%s1 + $0x24] sm:$0xf]
  %v74 = vld [vmem:[%s1 + $0x28] sm:$0xf]
  %v75 = vld [vmem:[%s1 + $0x2c] sm:$0xf]
  %v76 = vld [vmem:[%s1 + $0x30] sm:$0xf]
  %v77 = vld [vmem:[%s1 + $0x34] sm:$0xf]
  %v78 = vld [vmem:[%s1 + $0x38] sm:$0xf]
  %v79 = vld [vmem:[%s1 + $0x3c] sm:$0xf]
  %v80 = vld [vmem:[%s1 + $0x40] sm:$0xf]
  %v81 = vld [vmem:[%s1 + $0x44] sm:$0xf]
  %v82 = vld [vmem:[%s1 + $0x48] sm:$0xf]
  %v83 = vld [vmem:[%s1 + $0x4c] sm:$0xf]
  %v84 = vld [vmem:[%s1 + $0x50] sm:$0xf]
  %v85 = vld [vmem:[%s1 + $0x54] sm:$0xf]
  %v86 = vld [vmem:[%s1 + $0x58] sm:$0xf]
  %v87 = vld [vmem:[%s1 + $0x5c] sm:$0xf]
  %v88 = vld [vmem:[%s1 + $0x60] sm:$0xf]
  %v89 = vld [vmem:[%s1 + $0x64] sm:$0xf]
  %v90 = vld [vmem:[%s1 + $0x68] sm:$0xf]
  %v91 = vld [vmem:[%s1 + $0x6c] sm:$0xf]
  %v92 = vld [vmem:[%s1 + $0x70] sm:$0xf]
  %v93 = vld [vmem:[%s1 + $0x74] sm:$0xf]
  %v94 = vld [vmem:[%s1 + $0x78] sm:$0xf]
  %v95 = vld [vmem:[%s1 + $0x7c] sm:$0xf]
  %v128 = vunpack.c.l.b16 %v64
  %v129 = vunpack.c.l.b16 %v65
  %v130 = vunpack.c.l.b16 %v66
  %v131 = vunpack.c.l.b16 %v67
  %v132 = vunpack.c.l.b16 %v68
  %v133 = vunpack.c.l.b16 %v69
  %v134 = vunpack.c.l.b16 %v70
  %v135 = vunpack.c.l.b16 %v71
  %v136 = vunpack.c.l.b16 %v72
  %v137 = vunpack.c.l.b16 %v73
  %v138 = vunpack.c.l.b16 %v74
  %v139 = vunpack.c.l.b16 %v75
  %v140 = vunpack.c.l.b16 %v76
  %v141 = vunpack.c.l.b16 %v77
  %v142 = vunpack.c.l.b16 %v78
  %v143 = vunpack.c.l.b16 %v79
  %v144 = vunpack.c.l.b16 %v80
  %v145 = vunpack.c.l.b16 %v81
  %v146 = vunpack.c.l.b16 %v82
  %v147 = vunpack.c.l.b16 %v83
  %v148 = vunpack.c.l.b16 %v84
  %v149 = vunpack.c.l.b16 %v85
  %v150 = vunpack.c.l.b16 %v86
  %v151 = vunpack.c.l.b16 %v87
  %v152 = vunpack.c.l.b16 %v88
  %v153 = vunpack.c.l.b16 %v89
  %v154 = vunpack.c.l.b16 %v90
  %v155 = vunpack.c.l.b16 %v91
  %v156 = vunpack.c.l.b16 %v92
  %v157 = vunpack.c.l.b16 %v93
  %v158 = vunpack.c.l.b16 %v94
  %v159 = vunpack.c.l.b16 %v95
  %v160 = vpack.c.b16 %v129, %v128
  %v161 = vpack.c.b16 %v131, %v130
  %v162 = vpack.c.b16 %v133, %v132
  %v163 = vpack.c.b16 %v135, %v134
  %v164 = vpack.c.b16 %v137, %v136
  %v165 = vpack.c.b16 %v139, %v138
  %v166 = vpack.c.b16 %v141, %v140
  %v167 = vpack.c.b16 %v143, %v142
  %v168 = vpack.c.b16 %v145, %v144
  %v169 = vpack.c.b16 %v147, %v146
  %v170 = vpack.c.b16 %v149, %v148
  %v171 = vpack.c.b16 %v151, %v150
  %v172 = vpack.c.b16 %v153, %v152
  %v173 = vpack.c.b16 %v155, %v154
  %v174 = vpack.c.b16 %v157, %v156
  %v175 = vpack.c.b16 %v159, %v158
  %192 = vmatprep.subr.bf16.mxu0 0
  %193 = vmatpush1.bf16.msra.mxu0 %v167
  %194 = vmatprep.subr.bf16.mxu0 0
  %195 = vmatpush1.bf16.msra.mxu0 %v166
  %196 = vmatprep.subr.bf16.mxu0 0
  %197 = vmatpush1.bf16.msra.mxu0 %v165
  %198 = vmatprep.subr.bf16.mxu0 0
  %199 = vmatpush1.bf16.msra.mxu0 %v164
  %200 = vmatprep.subr.bf16.mxu0 0
  %201 = vmatpush1.bf16.msra.mxu0 %v163
  %202 = vmatprep.subr.bf16.mxu0 0
  %203 = vmatpush1.bf16.msra.mxu0 %v162
  %204 = vmatprep.subr.bf16.mxu0 0
  %205 = vmatpush1.bf16.msra.mxu0 %v161
  %206 = vmatprep.subr.bf16.mxu0 0
  %207 = vmatpush1.bf16.msra.mxu0 %v160
  %208 = vmatprep.subr.bf16.mxu0 0
  %209 = vmatpush2.bf16.msra.mxu0 %v175
  %210 = vmatprep.subr.bf16.mxu0 0
  %211 = vmatpush2.bf16.msra.mxu0 %v174
  %212 = vmatprep.subr.bf16.mxu0 0
  %213 = vmatpush2.bf16.msra.mxu0 %v173
  %214 = vmatprep.subr.bf16.mxu0 0
  %215 = vmatpush2.bf16.msra.mxu0 %v172
  %216 = vmatprep.subr.bf16.mxu0 0
  %217 = vmatpush2.bf16.msra.mxu0 %v171
  %218 = vmatprep.subr.bf16.mxu0 0
  %219 = vmatpush2.bf16.msra.mxu0 %v170
  %220 = vmatprep.subr.bf16.mxu0 0
  %221 = vmatpush2.bf16.msra.mxu0 %v169
  %222 = vmatprep.subr.bf16.mxu0 0
  %223 = vmatpush2.bf16.msra.mxu0 %v168
  %224 = vmatprep.mubr.bf16.mxu0 %v61
  %225 = vmatmul.mubr.bf16.gmra.mxu0 %v60
  %v226 = vpop.f32.mrf.mxu0
  %v227 = vadd.f32 0.0, %v226
  %v228 = vpop.f32.mrf.mxu0
  %v229 = vpop.f32.mrf.mxu0
  %v230 = vadd.f32 0.0, %v229
  %v231 = vpop.f32.mrf.mxu0
  %232 = vmatprep.mubr.bf16.mxu0 %v63
  %233 = vmatmul.mubr.bf16.gmra.mxu0 %v62
  %v234 = vpop.f32.mrf.mxu0
  %v235 = vadd.f32 0.0, %v234
  %v236 = vpop.f32.mrf.mxu0
  %v237 = vpop.f32.mrf.mxu0
  %v238 = vpop.f32.mrf.mxu0
  %239 = vdwg.mxu0
  %v240 = vrcp.pop %v53
  %v241 = vrcp.pop %v56
  %v242 = vrcp.pop %v59
  %v243 = vmul.f32 %v227, %v240
  %v244 = vmul.f32 %v230, %v241
  %v245 = vmul.f32 %v235, %v242
  %246 = vst [vmem:[%s2] sm:$0xff] %v243
  %247 = vst [vmem:[%s2 + $0x8] sm:$0xff] %v244
  %248 = vst [vmem:[%s2 + $0x10] sm:$0xff] %v245
  // Predicated region
  $region10: #{graph_contrastive_loss.2} parent=0 // pred_check
    _
  $region11: #{graph_contrastive_loss.2} parent=0 // pred_check_branch
    %250 = sbr.rel (0) target = $region13
  $region12: #{graph_contrastive_loss.2} parent=0 // pred_region
    _
  $region13: #{graph_contrastive_loss.2} parent=0 // pred_fallthru
    _
  // Predicated region
  $region14: #{graph_contrastive_loss.2} parent=0 // pred_check
    _
  $region15: #{graph_contrastive_loss.2} parent=0 // pred_check_branch
    %252 = sbr.rel (0) target = $region17
  $region16: #{graph_contrastive_loss.2} parent=0 // pred_region
    _
  $region17: #{graph_contrastive_loss.2} parent=0 // pred_fallthru
    _

// kernel: graph_contrastive_loss.3
$region0: #{graph_contrastive_loss.3}
  #allocation0 [shape = 'u32[]', space=smem, size = 0x4, offset = 0x4, fixed_abs, tag = 'smem constant byte address 0x4 - core index']
  #allocation1 [shape = 'u32[144,128]{1,0:T(1,128)}', space=vmem, size = 0x12000, scoped, tag = 'internal scratch']
  #allocation2 [shape = 'f32[1,1]{1,0:T(1,128)S(1)}', space=vmem, size = 0x200, scoped, tag = 'scoped memory for graph_contrastive_loss.3']
  %s0 = inlined_call_operand.vmem [shape: f32[128,128], index: 0, kind: input, shape index: {}]
  %s1 = inlined_call_operand.vmem [shape: f32[128,32], index: 1, kind: input, shape index: {}]
  %s2 = inlined_call_operand.vmem [shape: f32[1,32], index: 2, kind: input, shape index: {}]
  %s3 = inlined_call_operand.vmem [shape: f32[32,32], index: 3, kind: input, shape index: {}]
  %s4 = inlined_call_operand.vmem [shape: f32[1,32], index: 4, kind: input, shape index: {}]
  %s5 = inlined_call_operand.vmem [shape: f32[128,32], index: 5, kind: input, shape index: {}]
  %s6 = inlined_call_operand.vmem [shape: f32[8,128], index: 6, kind: input, shape index: {}]
  %s7 = inlined_call_operand.<no memory space> [shape: f32[1,1], index: 7, kind: input, shape index: {}]
  %s8 = inlined_call_operand.vmem [shape: f32[8,128], index: 8, kind: output, shape index: {}]
  %s9 = sld [smem:[#allocation0]]
  $region42: #{graph_contrastive_loss.3} parent=0
    _
  %s11 = ssub.s32 1, %s9
  %s12 = scalar_select 0, %s11, %s9
  %v13 = vstv %s7
  %14 = vst [vmem:[#allocation2] sm:$0x1] %v13
  // Predicated region
  $region2: #{graph_contrastive_loss.3} parent=0 // pred_check
    _
  $region3: #{graph_contrastive_loss.3} parent=0 // pred_check_branch
    %16 = sbr.rel (0) target = $region5
  $region4: #{graph_contrastive_loss.3} parent=0 // pred_region
    _
  $region5: #{graph_contrastive_loss.3} parent=0 // pred_fallthru
    _
  // Predicated region
  $region6: #{graph_contrastive_loss.3} parent=0 // pred_check
    _
  $region7: #{graph_contrastive_loss.3} parent=0 // pred_check_branch
    %18 = sbr.rel (0) target = $region9
  $region8: #{graph_contrastive_loss.3} parent=0 // pred_region
    _
  $region9: #{graph_contrastive_loss.3} parent=0 // pred_fallthru
    _
  // Predicated region
  $region10: #{graph_contrastive_loss.3} parent=0 // pred_check
    _
  $region11: #{graph_contrastive_loss.3} parent=0 // pred_check_branch
    %20 = sbr.rel (0) target = $region13
  $region12: #{graph_contrastive_loss.3} parent=0 // pred_region
    _
  $region13: #{graph_contrastive_loss.3} parent=0 // pred_fallthru
    _
  // Predicated region
  $region14: #{graph_contrastive_loss.3} parent=0 // pred_check
    _
  $region15: #{graph_contrastive_loss.3} parent=0 // pred_check_branch
    %22 = sbr.rel (0) target = $region17
  $region16: #{graph_contrastive_loss.3} parent=0 // pred_region
    _
  $region17: #{graph_contrastive_loss.3} parent=0 // pred_fallthru
    _
  // Predicated region
  $region18: #{graph_contrastive_loss.3} parent=0 // pred_check
    _
  $region19: #{graph_contrastive_loss.3} parent=0 // pred_check_branch
    %24 = sbr.rel (0) target = $region21
  $region20: #{graph_contrastive_loss.3} parent=0 // pred_region
    _
  $region21: #{graph_contrastive_loss.3} parent=0 // pred_fallthru
    _
  // Predicated region
  $region22: #{graph_contrastive_loss.3} parent=0 // pred_check
    _
  $region23: #{graph_contrastive_loss.3} parent=0 // pred_check_branch
    %26 = sbr.rel (0) target = $region25
  $region24: #{graph_contrastive_loss.3} parent=0 // pred_region
    _
  $region25: #{graph_contrastive_loss.3} parent=0 // pred_fallthru
    _
  // Predicated region
  $region26: #{graph_contrastive_loss.3} parent=0 // pred_check
    _
  $region27: #{graph_contrastive_loss.3} parent=0 // pred_check_branch
    %28 = sbr.rel (0) target = $region29
  $region28: #{graph_contrastive_loss.3} parent=0 // pred_region
    _
  $region29: #{graph_contrastive_loss.3} parent=0 // pred_fallthru
    _
  // Predicated region
  $region30: #{graph_contrastive_loss.3} parent=0 // pred_check
    _
  $region31: #{graph_contrastive_loss.3} parent=0 // pred_check_branch
    %30 = sbr.rel (0) target = $region33
  $region32: #{graph_contrastive_loss.3} parent=0 // pred_region
    _
  $region33: #{graph_contrastive_loss.3} parent=0 // pred_fallthru
    _
  %v31 = vld [vmem:[%s0] sm:$0xff]
  %v32 = vld [vmem:[%s0 + $0x8] sm:$0xff]
  %v33 = vld [vmem:[%s0 + $0x10] sm:$0xff]
  %v34 = vld [vmem:[%s0 + $0x18] sm:$0xff]
  %v35 = vld [vmem:[%s0 + $0x20] sm:$0xff]
  %v36 = vld [vmem:[%s0 + $0x28] sm:$0xff]
  %v37 = vld [vmem:[%s0 + $0x30] sm:$0xff]
  %v38 = vld [vmem:[%s0 + $0x38] sm:$0xff]
  %v39 = vld [vmem:[%s0 + $0x40] sm:$0xff]
  %v40 = vld [vmem:[%s0 + $0x48] sm:$0xff]
  %v41 = vld [vmem:[%s0 + $0x50] sm:$0xff]
  %v42 = vld [vmem:[%s0 + $0x58] sm:$0xff]
  %v43 = vld [vmem:[%s0 + $0x60] sm:$0xff]
  %v44 = vld [vmem:[%s0 + $0x68] sm:$0xff]
  %v45 = vld [vmem:[%s0 + $0x70] sm:$0xff]
  %v46 = vld [vmem:[%s0 + $0x78] sm:$0xff]
  %v47 = vld [vmem:[%s1] sm:$0xff]
  %v48 = vld [vmem:[%s1 + $0x8] sm:$0xff]
  %v49 = vld [vmem:[%s1 + $0x10] sm:$0xff]
  %v50 = vld [vmem:[%s1 + $0x18] sm:$0xff]
  %v51 = vld [vmem:[%s1 + $0x20] sm:$0xff]
  %v52 = vld [vmem:[%s1 + $0x28] sm:$0xff]
  %v53 = vld [vmem:[%s1 + $0x30] sm:$0xff]
  %v54 = vld [vmem:[%s1 + $0x38] sm:$0xff]
  %v55 = vld [vmem:[%s1 + $0x40] sm:$0xff]
  %v56 = vld [vmem:[%s1 + $0x48] sm:$0xff]
  %v57 = vld [vmem:[%s1 + $0x50] sm:$0xff]
  %v58 = vld [vmem:[%s1 + $0x58] sm:$0xff]
  %v59 = vld [vmem:[%s1 + $0x60] sm:$0xff]
  %v60 = vld [vmem:[%s1 + $0x68] sm:$0xff]
  %v61 = vld [vmem:[%s1 + $0x70] sm:$0xff]
  %v62 = vld [vmem:[%s1 + $0x78] sm:$0xff]
  %v63 = vld [vmem:[%s2] sm:$0x1]
  %v65 = vlaneseq
  %v66 = vshrl.u32 %v65, 7
  %v67 = vsub.s32 0, %v66
  %v68 = vrot.slane %v63, %v67
  %70 = vmatprep.subr.mxu0 0.0
  %71 = vmatpush1.msra.mxu0 %v62
  %72 = vmatprep.subr.mxu0 0.0
  %73 = vmatpush1.msra.mxu0 %v61
  %74 = vmatprep.subr.mxu0 0.0
  %75 = vmatpush1.msra.mxu0 %v60
  %76 = vmatprep.subr.mxu0 0.0
  %77 = vmatpush1.msra.mxu0 %v59
  %78 = vmatprep.subr.mxu0 0.0
  %79 = vmatpush1.msra.mxu0 %v58
  %80 = vmatprep.subr.mxu0 0.0
  %81 = vmatpush1.msra.mxu0 %v57
  %82 = vmatprep.subr.mxu0 0.0
  %83 = vmatpush1.msra.mxu0 %v56
  %84 = vmatprep.subr.mxu0 0.0
  %85 = vmatpush1.msra.mxu0 %v55
  %86 = vmatprep.subr.mxu0 0.0
  %87 = vmatpush1.msra.mxu0 %v54
  %88 = vmatprep.subr.mxu0 0.0
  %89 = vmatpush1.msra.mxu0 %v53
  %90 = vmatprep.subr.mxu0 0.0
  %91 = vmatpush1.msra.mxu0 %v52
  %92 = vmatprep.subr.mxu0 0.0
  %93 = vmatpush1.msra.mxu0 %v51
  %94 = vmatprep.subr.mxu0 0.0
  %95 = vmatpush1.msra.mxu0 %v50
  %96 = vmatprep.subr.mxu0 0.0
  %97 = vmatpush1.msra.mxu0 %v49
  %98 = vmatprep.subr.mxu0 0.0
  %99 = vmatpush1.msra.mxu0 %v48
  %100 = vmatprep.subr.mxu0 0.0
  %101 = vmatpush1.msra.mxu0 %v47
  %102 = vmatprep.subr.mxu0 0.0
  %103 = vmatpush2.msra.mxu0 0.0
  %104 = vmatprep.subr.mxu0 0.0
  %105 = vmatpush2.msra.mxu0 0.0
  %106 = vmatprep.subr.mxu0 0.0
  %107 = vmatpush2.msra.mxu0 0.0
  %108 = vmatprep.subr.mxu0 0.0
  %109 = vmatpush2.msra.mxu0 0.0
  %110 = vmatprep.subr.mxu0 0.0
  %111 = vmatpush2.msra.mxu0 0.0
  %112 = vmatprep.subr.mxu0 0.0
  %113 = vmatpush2.msra.mxu0 0.0
  %114 = vmatprep.subr.mxu0 0.0
  %115 = vmatpush2.msra.mxu0 0.0
  %116 = vmatprep.subr.mxu0 0.0
  %117 = vmatpush2.msra.mxu0 0.0
  %118 = vmatprep.subr.mxu0 0.0
  %119 = vmatpush2.msra.mxu0 0.0
  %120 = vmatprep.subr.mxu0 0.0
  %121 = vmatpush2.msra.mxu0 0.0
  %122 = vmatprep.subr.mxu0 0.0
  %123 = vmatpush2.msra.mxu0 0.0
  %124 = vmatprep.subr.mxu0 0.0
  %125 = vmatpush2.msra.mxu0 0.0
  %126 = vmatprep.subr.mxu0 0.0
  %127 = vmatpush2.msra.mxu0 0.0
  %128 = vmatprep.subr.mxu0 0.0
  %129 = vmatpush2.msra.mxu0 0.0
  %130 = vmatprep.subr.mxu0 0.0
  %131 = vmatpush2.msra.mxu0 0.0
  %132 = vmatprep.subr.mxu0 0.0
  %133 = vmatpush2.msra.mxu0 0.0
  %134 = vmatprep.mubr.f32.mxu0 0.0
  %135 = vmatmul.mubr.f32.gmra.mxu0 %v31
  %v136 = vpop.f32.mrf.mxu0
  %v137 = vadd.f32 %v68, %v136
  %v138 = vpop.f32.mrf.mxu0
  %139 = vmatprep.mubr.f32.mxu0 0.0
  %140 = vmatmul.mubr.f32.gmra.mxu0 %v32
  %v141 = vpop.f32.mrf.mxu0
  %v142 = vadd.f32 %v68, %v141
  %v143 = vpop.f32.mrf.mxu0
  %144 = vmatprep.mubr.f32.mxu0 0.0
  %145 = vmatmul.mubr.f32.gmra.mxu0 %v33
  %v146 = vpop.f32.mrf.mxu0
  %v147 = vadd.f32 %v68, %v146
  %v148 = vpop.f32.mrf.mxu0
  %149 = vmatprep.mubr.f32.mxu0 0.0
  %150 = vmatmul.mubr.f32.gmra.mxu0 %v34
  %v151 = vpop.f32.mrf.mxu0
  %v152 = vadd.f32 %v68, %v151
  %v153 = vpop.f32.mrf.mxu0
  %154 = vmatprep.mubr.f32.mxu0 0.0
  %155 = vmatmul.mubr.f32.gmra.mxu0 %v35
  %v156 = vpop.f32.mrf.mxu0
  %v157 = vadd.f32 %v68, %v156
  %v158 = vpop.f32.mrf.mxu0
  %159 = vmatprep.mubr.f32.mxu0 0.0
  %160 = vmatmul.mubr.f32.gmra.mxu0 %v36
  %v161 = vpop.f32.mrf.mxu0
  %v162 = vadd.f32 %v68, %v161
  %v163 = vpop.f32.mrf.mxu0
  %164 = vmatprep.mubr.f32.mxu0 0.0
  %165 = vmatmul.mubr.f32.gmra.mxu0 %v37
  %v166 = vpop.f32.mrf.mxu0
  %v167 = vadd.f32 %v68, %v166
  %v168 = vpop.f32.mrf.mxu0
  %169 = vmatprep.mubr.f32.mxu0 0.0
  %170 = vmatmul.mubr.f32.gmra.mxu0 %v38
  %v171 = vpop.f32.mrf.mxu0
  %v172 = vadd.f32 %v68, %v171
  %v173 = vpop.f32.mrf.mxu0
  %174 = vmatprep.mubr.f32.mxu0 0.0
  %175 = vmatmul.mubr.f32.gmra.mxu0 %v39
  %v176 = vpop.f32.mrf.mxu0
  %v177 = vadd.f32 %v68, %v176
  %v178 = vpop.f32.mrf.mxu0
  %179 = vmatprep.mubr.f32.mxu0 0.0
  %180 = vmatmul.mubr.f32.gmra.mxu0 %v40
  %v181 = vpop.f32.mrf.mxu0
  %v182 = vadd.f32 %v68, %v181
  %v183 = vpop.f32.mrf.mxu0
  %184 = vmatprep.mubr.f32.mxu0 0.0
  %185 = vmatmul.mubr.f32.gmra.mxu0 %v41
  %v186 = vpop.f32.mrf.mxu0
  %v187 = vadd.f32 %v68, %v186
  %v188 = vpop.f32.mrf.mxu0
  %189 = vmatprep.mubr.f32.mxu0 0.0
  %190 = vmatmul.mubr.f32.gmra.mxu0 %v42
  %v191 = vpop.f32.mrf.mxu0
  %v192 = vadd.f32 %v68, %v191
  %v193 = vpop.f32.mrf.mxu0
  %194 = vmatprep.mubr.f32.mxu0 0.0
  %195 = vmatmul.mubr.f32.gmra.mxu0 %v43
  %v196 = vpop.f32.mrf.mxu0
  %v197 = vadd.f32 %v68, %v196
  %v198 = vpop.f32.mrf.mxu0
  %199 = vmatprep.mubr.f32.mxu0 0.0
  %200 = vmatmul.mubr.f32.gmra.mxu0 %v44
  %v201 = vpop.f32.mrf.mxu0
  %v202 = vadd.f32 %v68, %v201
  %v203 = vpop.f32.mrf.mxu0
  %204 = vmatprep.mubr.f32.mxu0 0.0
  %205 = vmatmul.mubr.f32.gmra.mxu0 %v45
  %v206 = vpop.f32.mrf.mxu0
  %v207 = vadd.f32 %v68, %v206
  %v208 = vpop.f32.mrf.mxu0
  %209 = vmatprep.mubr.f32.mxu0 0.0
  %210 = vmatmul.mubr.f32.gmra.mxu0 %v46
  %v211 = vpop.f32.mrf.mxu0
  %v212 = vadd.f32 %v68, %v211
  %v213 = vpop.f32.mrf.mxu0
  %214 = vdwg.mxu0
  %v215 = vmax.f32 %v137, 0.0
  %v216 = vmax.f32 %v142, 0.0
  %v217 = vmax.f32 %v147, 0.0
  %v218 = vmax.f32 %v152, 0.0
  %v219 = vmax.f32 %v157, 0.0
  %v220 = vmax.f32 %v162, 0.0
  %v221 = vmax.f32 %v167, 0.0
  %v222 = vmax.f32 %v172, 0.0
  %v223 = vmax.f32 %v177, 0.0
  %v224 = vmax.f32 %v182, 0.0
  %v225 = vmax.f32 %v187, 0.0
  %v226 = vmax.f32 %v192, 0.0
  %v227 = vmax.f32 %v197, 0.0
  %v228 = vmax.f32 %v202, 0.0
  %v229 = vmax.f32 %v207, 0.0
  %v230 = vmax.f32 %v212, 0.0
  %231 = vmatprep.subr.mxu0 0.0
  %232 = vmatpush1.msra.mxu0 %v230
  %233 = vmatprep.subr.mxu0 0.0
  %234 = vmatpush1.msra.mxu0 %v229
  %235 = vmatprep.subr.mxu0 0.0
  %236 = vmatpush1.msra.mxu0 %v228
  %237 = vmatprep.subr.mxu0 0.0
  %238 = vmatpush1.msra.mxu0 %v227
  %239 = vmatprep.subr.mxu0 0.0
  %240 = vmatpush1.msra.mxu0 %v226
  %241 = vmatprep.subr.mxu0 0.0
  %242 = vmatpush1.msra.mxu0 %v225
  %243 = vmatprep.subr.mxu0 0.0
  %244 = vmatpush1.msra.mxu0 %v224
  %245 = vmatprep.subr.mxu0 0.0
  %246 = vmatpush1.msra.mxu0 %v223
  %247 = vmatprep.subr.mxu0 0.0
  %248 = vmatpush1.msra.mxu0 %v222
  %249 = vmatprep.subr.mxu0 0.0
  %250 = vmatpush1.msra.mxu0 %v221
  %251 = vmatprep.subr.mxu0 0.0
  %252 = vmatpush1.msra.mxu0 %v220
  %253 = vmatprep.subr.mxu0 0.0
  %254 = vmatpush1.msra.mxu0 %v219
  %255 = vmatprep.subr.mxu0 0.0
  %256 = vmatpush1.msra.mxu0 %v218
  %257 = vmatprep.subr.mxu0 0.0
  %258 = vmatpush1.msra.mxu0 %v217
  %259 = vmatprep.subr.mxu0 0.0
  %260 = vmatpush1.msra.mxu0 %v216
  %261 = vmatprep.subr.mxu0 0.0
  %262 = vmatpush1.msra.mxu0 %v215
  %263 = vmatprep.subr.mxu0 0.0
  %264 = vmatpush2.msra.mxu0 0.0
  %265 = vmatprep.subr.mxu0 0.0
  %266 = vmatpush2.msra.mxu0 0.0
  %267 = vmatprep.subr.mxu0 0.0
  %268 = vmatpush2.msra.mxu0 0.0
  %269 = vmatprep.subr.mxu0 0.0
  %270 = vmatpush2.msra.mxu0 0.0
  %271 = vmatprep.subr.mxu0 0.0
  %272 = vmatpush2.msra.mxu0 0.0
  %273 = vmatprep.subr.mxu0 0.0
  %274 = vmatpush2.msra.mxu0 0.0
  %275 = vmatprep.subr.mxu0 0.0
  %276 = vmatpush2.msra.mxu0 0.0
  %277 = vmatprep.subr.mxu0 0.0
  %278 = vmatpush2.msra.mxu0 0.0
  %279 = vmatprep.subr.mxu0 0.0
  %280 = vmatpush2.msra.mxu0 0.0
  %281 = vmatprep.subr.mxu0 0.0
  %282 = vmatpush2.msra.mxu0 0.0
  %283 = vmatprep.subr.mxu0 0.0
  %284 = vmatpush2.msra.mxu0 0.0
  %285 = vmatprep.subr.mxu0 0.0
  %286 = vmatpush2.msra.mxu0 0.0
  %287 = vmatprep.subr.mxu0 0.0
  %288 = vmatpush2.msra.mxu0 0.0
  %289 = vmatprep.subr.mxu0 0.0
  %290 = vmatpush2.msra.mxu0 0.0
  %291 = vmatprep.subr.mxu0 0.0
  %292 = vmatpush2.msra.mxu0 0.0
  %293 = vmatprep.subr.mxu0 0.0
  %294 = vmatpush2.msra.mxu0 0.0
  %295 = vmatprep.mubr.f32.mxu0 0.0
  %296 = vmatmul.mubr.f32.gmra.mxu0 %v31
  %v297 = vpop.f32.mrf.mxu0
  %v298 = vadd.f32 0.0, %v297
  %v299 = vpop.f32.mrf.mxu0
  %300 = vmatprep.mubr.f32.mxu0 0.0
  %301 = vmatmul.mubr.f32.gmra.mxu0 %v32
  %v302 = vpop.f32.mrf.mxu0
  %v303 = vadd.f32 0.0, %v302
  %v304 = vpop.f32.mrf.mxu0
  %305 = vmatprep.mubr.f32.mxu0 0.0
  %306 = vmatmul.mubr.f32.gmra.mxu0 %v33
  %v307 = vpop.f32.mrf.mxu0
  %v308 = vadd.f32 0.0, %v307
  %v309 = vpop.f32.mrf.mxu0
  %310 = vmatprep.mubr.f32.mxu0 0.0
  %311 = vmatmul.mubr.f32.gmra.mxu0 %v34
  %v312 = vpop.f32.mrf.mxu0
  %v313 = vadd.f32 0.0, %v312
  %v314 = vpop.f32.mrf.mxu0
  %315 = vmatprep.mubr.f32.mxu0 0.0
  %316 = vmatmul.mubr.f32.gmra.mxu0 %v35
  %v317 = vpop.f32.mrf.mxu0
  %v318 = vadd.f32 0.0, %v317
  %v319 = vpop.f32.mrf.mxu0
  %320 = vmatprep.mubr.f32.mxu0 0.0
  %321 = vmatmul.mubr.f32.gmra.mxu0 %v36
  %v322 = vpop.f32.mrf.mxu0
  %v323 = vadd.f32 0.0, %v322
  %v324 = vpop.f32.mrf.mxu0
  %325 = vmatprep.mubr.f32.mxu0 0.0
  %326 = vmatmul.mubr.f32.gmra.mxu0 %v37
  %v327 = vpop.f32.mrf.mxu0
  %v328 = vadd.f32 0.0, %v327
  %v329 = vpop.f32.mrf.mxu0
  %330 = vmatprep.mubr.f32.mxu0 0.0
  %331 = vmatmul.mubr.f32.gmra.mxu0 %v38
  %v332 = vpop.f32.mrf.mxu0
  %v333 = vadd.f32 0.0, %v332
  %v334 = vpop.f32.mrf.mxu0
  %335 = vmatprep.mubr.f32.mxu0 0.0
  %336 = vmatmul.mubr.f32.gmra.mxu0 %v39
  %v337 = vpop.f32.mrf.mxu0
  %v338 = vadd.f32 0.0, %v337
  %v339 = vpop.f32.mrf.mxu0
  %340 = vmatprep.mubr.f32.mxu0 0.0
  %341 = vmatmul.mubr.f32.gmra.mxu0 %v40
  %v342 = vpop.f32.mrf.mxu0
  %v343 = vadd.f32 0.0, %v342
  %v344 = vpop.f32.mrf.mxu0
  %345 = vmatprep.mubr.f32.mxu0 0.0
  %346 = vmatmul.mubr.f32.gmra.mxu0 %v41
  %v347 = vpop.f32.mrf.mxu0
  %v348 = vadd.f32 0.0, %v347
  %v349 = vpop.f32.mrf.mxu0
  %350 = vmatprep.mubr.f32.mxu0 0.0
  %351 = vmatmul.mubr.f32.gmra.mxu0 %v42
  %v352 = vpop.f32.mrf.mxu0
  %v353 = vadd.f32 0.0, %v352
  %v354 = vpop.f32.mrf.mxu0
  %355 = vmatprep.mubr.f32.mxu0 0.0
  %356 = vmatmul.mubr.f32.gmra.mxu0 %v43
  %v357 = vpop.f32.mrf.mxu0
  %v358 = vadd.f32 0.0, %v357
  %v359 = vpop.f32.mrf.mxu0
  %360 = vmatprep.mubr.f32.mxu0 0.0
  %361 = vmatmul.mubr.f32.gmra.mxu0 %v44
  %v362 = vpop.f32.mrf.mxu0
  %v363 = vadd.f32 0.0, %v362
  %v364 = vpop.f32.mrf.mxu0
  %365 = vmatprep.mubr.f32.mxu0 0.0
  %366 = vmatmul.mubr.f32.gmra.mxu0 %v45
  %v367 = vpop.f32.mrf.mxu0
  %v368 = vadd.f32 0.0, %v367
  %v369 = vpop.f32.mrf.mxu0
  %370 = vmatprep.mubr.f32.mxu0 0.0
  %371 = vmatmul.mubr.f32.gmra.mxu0 %v46
  %v372 = vpop.f32.mrf.mxu0
  %v373 = vadd.f32 0.0, %v372
  %v374 = vpop.f32.mrf.mxu0
  %375 = vdwg.mxu0
  %v376 = vld [vmem:[%s3] sm:$0xff]
  %v377 = vld [vmem:[%s3 + $0x8] sm:$0xff]
  %v378 = vld [vmem:[%s3 + $0x10] sm:$0xff]
  %v379 = vld [vmem:[%s3 + $0x18] sm:$0xff]
  %v380 = vld [vmem:[%s4] sm:$0x1]
  %v382 = vlaneseq
  %v383 = vshrl.u32 %v382, 7
  %v384 = vsub.s32 0, %v383
  %v385 = vrot.slane %v380, %v384
  %vm387 = vcmask 261120
  %v389 = vsel %vm387, %v298, 0
  %v392 = vsel %vm387, %v303, 0
  %v395 = vsel %vm387, %v308, 0
  %v398 = vsel %vm387, %v313, 0
  %v401 = vsel %vm387, %v318, 0
  %v404 = vsel %vm387, %v323, 0
  %v407 = vsel %vm387, %v328, 0
  %v410 = vsel %vm387, %v333, 0
  %v413 = vsel %vm387, %v338, 0
  %v416 = vsel %vm387, %v343, 0
  %v419 = vsel %vm387, %v348, 0
  %v422 = vsel %vm387, %v353, 0
  %v425 = vsel %vm387, %v358, 0
  %v428 = vsel %vm387, %v363, 0
  %v431 = vsel %vm387, %v368, 0
  %v434 = vsel %vm387, %v373, 0
  %436 = vmatprep.subr.mxu0 0.0
  %437 = vmatpush1.msra.mxu0 0.0
  %438 = vmatprep.subr.mxu0 0.0
  %439 = vmatpush1.msra.mxu0 0.0
  %440 = vmatprep.subr.mxu0 0.0
  %441 = vmatpush1.msra.mxu0 0.0
  %442 = vmatprep.subr.mxu0 0.0
  %443 = vmatpush1.msra.mxu0 0.0
  %444 = vmatprep.subr.mxu0 0.0
  %445 = vmatpush1.msra.mxu0 0.0
  %446 = vmatprep.subr.mxu0 0.0
  %447 = vmatpush1.msra.mxu0 0.0
  %448 = vmatprep.subr.mxu0 0.0
  %449 = vmatpush1.msra.mxu0 0.0
  %450 = vmatprep.subr.mxu0 0.0
  %451 = vmatpush1.msra.mxu0 0.0
  %452 = vmatprep.subr.mxu0 0.0
  %453 = vmatpush1.msra.mxu0 0.0
  %454 = vmatprep.subr.mxu0 0.0
  %455 = vmatpush1.msra.mxu0 0.0
  %456 = vmatprep.subr.mxu0 0.0
  %457 = vmatpush1.msra.mxu0 0.0
  %458 = vmatprep.subr.mxu0 0.0
  %459 = vmatpush1.msra.mxu0 0.0
  %460 = vmatprep.subr.mxu0 0.0
  %461 = vmatpush1.msra.mxu0 %v379
  %462 = vmatprep.subr.mxu0 0.0
  %463 = vmatpush1.msra.mxu0 %v378
  %464 = vmatprep.subr.mxu0 0.0
  %465 = vmatpush1.msra.mxu0 %v377
  %466 = vmatprep.subr.mxu0 0.0
  %467 = vmatpush1.msra.mxu0 %v376
  %468 = vmatprep.subr.mxu0 0.0
  %469 = vmatpush2.msra.mxu0 0.0
  %470 = vmatprep.subr.mxu0 0.0
  %471 = vmatpush2.msra.mxu0 0.0
  %472 = vmatprep.subr.mxu0 0.0
  %473 = vmatpush2.msra.mxu0 0.0
  %474 = vmatprep.subr.mxu0 0.0
  %475 = vmatpush2.msra.mxu0 0.0
  %476 = vmatprep.subr.mxu0 0.0
  %477 = vmatpush2.msra.mxu0 0.0
  %478 = vmatprep.subr.mxu0 0.0
  %479 = vmatpush2.msra.mxu0 0.0
  %480 = vmatprep.subr.mxu0 0.0
  %481 = vmatpush2.msra.mxu0 0.0
  %482 = vmatprep.subr.mxu0 0.0
  %483 = vmatpush2.msra.mxu0 0.0
  %484 = vmatprep.subr.mxu0 0.0
  %485 = vmatpush2.msra.mxu0 0.0
  %486 = vmatprep.subr.mxu0 0.0
  %487 = vmatpush2.msra.mxu0 0.0
  %488 = vmatprep.subr.mxu0 0.0
  %489 = vmatpush2.msra.mxu0 0.0
  %490 = vmatprep.subr.mxu0 0.0
  %491 = vmatpush2.msra.mxu0 0.0
  %492 = vmatprep.subr.mxu0 0.0
  %493 = vmatpush2.msra.mxu0 0.0
  %494 = vmatprep.subr.mxu0 0.0
  %495 = vmatpush2.msra.mxu0 0.0
  %496 = vmatprep.subr.mxu0 0.0
  %497 = vmatpush2.msra.mxu0 0.0
  %498 = vmatprep.subr.mxu0 0.0
  %499 = vmatpush2.msra.mxu0 0.0
  %500 = vmatprep.mubr.f32.mxu0 0.0
  %501 = vmatmul.mubr.f32.gmra.mxu0 %v389
  %v502 = vpop.f32.mrf.mxu0
  %v503 = vadd.f32 %v385, %v502
  %v504 = vpop.f32.mrf.mxu0
  %505 = vmatprep.mubr.f32.mxu0 0.0
  %506 = vmatmul.mubr.f32.gmra.mxu0 %v392
  %v507 = vpop.f32.mrf.mxu0
  %v508 = vadd.f32 %v385, %v507
  %v509 = vpop.f32.mrf.mxu0
  %510 = vmatprep.mubr.f32.mxu0 0.0
  %511 = vmatmul.mubr.f32.gmra.mxu0 %v395
  %v512 = vpop.f32.mrf.mxu0
  %v513 = vadd.f32 %v385, %v512
  %v514 = vpop.f32.mrf.mxu0
  %515 = vmatprep.mubr.f32.mxu0 0.0
  %516 = vmatmul.mubr.f32.gmra.mxu0 %v398
  %v517 = vpop.f32.mrf.mxu0
  %v518 = vadd.f32 %v385, %v517
  %v519 = vpop.f32.mrf.mxu0
  %520 = vmatprep.mubr.f32.mxu0 0.0
  %521 = vmatmul.mubr.f32.gmra.mxu0 %v401
  %v522 = vpop.f32.mrf.mxu0
  %v523 = vadd.f32 %v385, %v522
  %v524 = vpop.f32.mrf.mxu0
  %525 = vmatprep.mubr.f32.mxu0 0.0
  %526 = vmatmul.mubr.f32.gmra.mxu0 %v404
  %v527 = vpop.f32.mrf.mxu0
  %v528 = vadd.f32 %v385, %v527
  %v529 = vpop.f32.mrf.mxu0
  %530 = vmatprep.mubr.f32.mxu0 0.0
  %531 = vmatmul.mubr.f32.gmra.mxu0 %v407
  %v532 = vpop.f32.mrf.mxu0
  %v533 = vadd.f32 %v385, %v532
  %v534 = vpop.f32.mrf.mxu0
  %535 = vmatprep.mubr.f32.mxu0 0.0
  %536 = vmatmul.mubr.f32.gmra.mxu0 %v410
  %v537 = vpop.f32.mrf.mxu0
  %v538 = vadd.f32 %v385, %v537
  %v539 = vpop.f32.mrf.mxu0
  %540 = vmatprep.mubr.f32.mxu0 0.0
  %541 = vmatmul.mubr.f32.gmra.mxu0 %v413
  %v542 = vpop.f32.mrf.mxu0
  %v543 = vadd.f32 %v385, %v542
  %v544 = vpop.f32.mrf.mxu0
  %545 = vmatprep.mubr.f32.mxu0 0.0
  %546 = vmatmul.mubr.f32.gmra.mxu0 %v416
  %v547 = vpop.f32.mrf.mxu0
  %v548 = vadd.f32 %v385, %v547
  %v549 = vpop.f32.mrf.mxu0
  %550 = vmatprep.mubr.f32.mxu0 0.0
  %551 = vmatmul.mubr.f32.gmra.mxu0 %v419
  %v552 = vpop.f32.mrf.mxu0
  %v553 = vadd.f32 %v385, %v552
  %v554 = vpop.f32.mrf.mxu0
  %555 = vmatprep.mubr.f32.mxu0 0.0
  %556 = vmatmul.mubr.f32.gmra.mxu0 %v422
  %v557 = vpop.f32.mrf.mxu0
  %v558 = vadd.f32 %v385, %v557
  %v559 = vpop.f32.mrf.mxu0
  %560 = vmatprep.mubr.f32.mxu0 0.0
  %561 = vmatmul.mubr.f32.gmra.mxu0 %v425
  %v562 = vpop.f32.mrf.mxu0
  %v563 = vadd.f32 %v385, %v562
  %v564 = vpop.f32.mrf.mxu0
  %565 = vmatprep.mubr.f32.mxu0 0.0
  %566 = vmatmul.mubr.f32.gmra.mxu0 %v428
  %v567 = vpop.f32.mrf.mxu0
  %v568 = vadd.f32 %v385, %v567
  %v569 = vpop.f32.mrf.mxu0
  %570 = vmatprep.mubr.f32.mxu0 0.0
  %571 = vmatmul.mubr.f32.gmra.mxu0 %v431
  %v572 = vpop.f32.mrf.mxu0
  %v573 = vadd.f32 %v385, %v572
  %v574 = vpop.f32.mrf.mxu0
  %575 = vmatprep.mubr.f32.mxu0 0.0
  %576 = vmatmul.mubr.f32.gmra.mxu0 %v434
  %v577 = vpop.f32.mrf.mxu0
  %v578 = vadd.f32 %v385, %v577
  %v579 = vpop.f32.mrf.mxu0
  %580 = vdwg.mxu0
  %v581 = vmax.f32 %v503, 0.0
  %v582 = vmax.f32 %v508, 0.0
  %v583 = vmax.f32 %v513, 0.0
  %v584 = vmax.f32 %v518, 0.0
  %v585 = vmax.f32 %v523, 0.0
  %v586 = vmax.f32 %v528, 0.0
  %v587 = vmax.f32 %v533, 0.0
  %v588 = vmax.f32 %v538, 0.0
  %v589 = vmax.f32 %v543, 0.0
  %v590 = vmax.f32 %v548, 0.0
  %v591 = vmax.f32 %v553, 0.0
  %v592 = vmax.f32 %v558, 0.0
  %v593 = vmax.f32 %v563, 0.0
  %v594 = vmax.f32 %v568, 0.0
  %v595 = vmax.f32 %v573, 0.0
  %v596 = vmax.f32 %v578, 0.0
  %v597 = vld [vmem:[%s5] sm:$0xff]
  %v598 = vld [vmem:[%s5 + $0x8] sm:$0xff]
  %v599 = vld [vmem:[%s5 + $0x10] sm:$0xff]
  %v600 = vld [vmem:[%s5 + $0x18] sm:$0xff]
  %v601 = vld [vmem:[%s5 + $0x20] sm:$0xff]
  %v602 = vld [vmem:[%s5 + $0x28] sm:$0xff]
  %v603 = vld [vmem:[%s5 + $0x30] sm:$0xff]
  %v604 = vld [vmem:[%s5 + $0x38] sm:$0xff]
  %v605 = vld [vmem:[%s5 + $0x40] sm:$0xff]
  %v606 = vld [vmem:[%s5 + $0x48] sm:$0xff]
  %v607 = vld [vmem:[%s5 + $0x50] sm:$0xff]
  %v608 = vld [vmem:[%s5 + $0x58] sm:$0xff]
  %v609 = vld [vmem:[%s5 + $0x60] sm:$0xff]
  %v610 = vld [vmem:[%s5 + $0x68] sm:$0xff]
  %v611 = vld [vmem:[%s5 + $0x70] sm:$0xff]
  %v612 = vld [vmem:[%s5 + $0x78] sm:$0xff]
  %v613 = vmul.f32 %v581, %v597
  %v614 = vmul.f32 %v582, %v598
  %v615 = vmul.f32 %v583, %v599
  %v616 = vmul.f32 %v584, %v600
  %v617 = vmul.f32 %v585, %v601
  %v618 = vmul.f32 %v586, %v602
  %v619 = vmul.f32 %v587, %v603
  %v620 = vmul.f32 %v588, %v604
  %v621 = vmul.f32 %v589, %v605
  %v622 = vmul.f32 %v590, %v606
  %v623 = vmul.f32 %v591, %v607
  %v624 = vmul.f32 %v592, %v608
  %v625 = vmul.f32 %v593, %v609
  %v626 = vmul.f32 %v594, %v610
  %v627 = vmul.f32 %v595, %v611
  %v628 = vmul.f32 %v596, %v612
  %v629 = vld [vmem:[%s6] sm:$0xff]
  %630 = vmatprep.subr.mxu0 0.0
  %631 = vmatpush1.msra.mxu0 %v628
  %632 = vmatprep.subr.mxu0 0.0
  %633 = vmatpush1.msra.mxu0 %v627
  %634 = vmatprep.subr.mxu0 0.0
  %635 = vmatpush1.msra.mxu0 %v626
  %636 = vmatprep.subr.mxu0 0.0
  %637 = vmatpush1.msra.mxu0 %v625
  %638 = vmatprep.subr.mxu0 0.0
  %639 = vmatpush1.msra.mxu0 %v624
  %640 = vmatprep.subr.mxu0 0.0
  %641 = vmatpush1.msra.mxu0 %v623
  %642 = vmatprep.subr.mxu0 0.0
  %643 = vmatpush1.msra.mxu0 %v622
  %644 = vmatprep.subr.mxu0 0.0
  %645 = vmatpush1.msra.mxu0 %v621
  %646 = vmatprep.subr.mxu0 0.0
  %647 = vmatpush1.msra.mxu0 %v620
  %648 = vmatprep.subr.mxu0 0.0
  %649 = vmatpush1.msra.mxu0 %v619
  %650 = vmatprep.subr.mxu0 0.0
  %651 = vmatpush1.msra.mxu0 %v618
  %652 = vmatprep.subr.mxu0 0.0
  %653 = vmatpush1.msra.mxu0 %v617
  %654 = vmatprep.subr.mxu0 0.0
  %655 = vmatpush1.msra.mxu0 %v616
  %656 = vmatprep.subr.mxu0 0.0
  %657 = vmatpush1.msra.mxu0 %v615
  %658 = vmatprep.subr.mxu0 0.0
  %659 = vmatpush1.msra.mxu0 %v614
  %660 = vmatprep.subr.mxu0 0.0
  %661 = vmatpush1.msra.mxu0 %v613
  %662 = vmatprep.subr.mxu0 0.0
  %663 = vmatpush2.msra.mxu0 0.0
  %664 = vmatprep.subr.mxu0 0.0
  %665 = vmatpush2.msra.mxu0 0.0
  %666 = vmatprep.subr.mxu0 0.0
  %667 = vmatpush2.msra.mxu0 0.0
  %668 = vmatprep.subr.mxu0 0.0
  %669 = vmatpush2.msra.mxu0 0.0
  %670 = vmatprep.subr.mxu0 0.0
  %671 = vmatpush2.msra.mxu0 0.0
  %672 = vmatprep.subr.mxu0 0.0
  %673 = vmatpush2.msra.mxu0 0.0
  %674 = vmatprep.subr.mxu0 0.0
  %675 = vmatpush2.msra.mxu0 0.0
  %676 = vmatprep.subr.mxu0 0.0
  %677 = vmatpush2.msra.mxu0 0.0
  %678 = vmatprep.subr.mxu0 0.0
  %679 = vmatpush2.msra.mxu0 0.0
  %680 = vmatprep.subr.mxu0 0.0
  %681 = vmatpush2.msra.mxu0 0.0
  %682 = vmatprep.subr.mxu0 0.0
  %683 = vmatpush2.msra.mxu0 0.0
  %684 = vmatprep.subr.mxu0 0.0
  %685 = vmatpush2.msra.mxu0 0.0
  %686 = vmatprep.subr.mxu0 0.0
  %687 = vmatpush2.msra.mxu0 0.0
  %688 = vmatprep.subr.mxu0 0.0
  %689 = vmatpush2.msra.mxu0 0.0
  %690 = vmatprep.subr.mxu0 0.0
  %691 = vmatpush2.msra.mxu0 0.0
  %692 = vmatprep.subr.mxu0 0.0
  %693 = vmatpush2.msra.mxu0 0.0
  %694 = vmatprep.mubr.f32.mxu0 0.0
  %695 = vmatmul.mubr.f32.gmra.mxu0 %v629
  %v696 = vpop.f32.mrf.mxu0
  %v697 = vadd.f32 0.0, %v696
  %v698 = vpop.f32.mrf.mxu0
  %699 = vdwg.mxu0
  %v700 = vsel %vm387, %v697, 0.0
  %701 = vadd.xlane.f32.xlu0 %v700
  %v702 = vpop.xlane.xlu0 %701
  %v703 = vld [vmem:[#allocation2] sm:$0x1]
  %v705 = vlaneseq
  %v706 = vshrl.u32 %v705, 7
  %v707 = vsub.s32 0, %v706
  %v708 = vrot.slane %v703, %v707
  %v710 = vadd.f32 %v702, %v708
  %v711 = vsub.f32 0.0, %v710
  %v712 = vmul.f32 %v711, 1.442695
  %v713 = vpow.pop %v712
  %v714 = vadd.f32 %v713, 1.0
  %v715 = vrcp.pop %v714
  %v716 = vmul.f32 1.0, %v715
  %718 = vset.pattern.permute.xlu0 0
  %719 = vperm.xlu0 %718, %v716
  %v720 = vpop.permute.xlu0 %719
  %722 = vst [vmem:[%s8] sm:$0xff] %v720
  // Predicated region
  $region34: #{graph_contrastive_loss.3} parent=0 // pred_check
    _
  $region35: #{graph_contrastive_loss.3} parent=0 // pred_check_branch
    %724 = sbr.rel (0) target = $region37
  $region36: #{graph_contrastive_loss.3} parent=0 // pred_region
    _
  $region37: #{graph_contrastive_loss.3} parent=0 // pred_fallthru
    _
  // Predicated region
  $region38: #{graph_contrastive_loss.3} parent=0 // pred_check
    _
  $region39: #{graph_contrastive_loss.3} parent=0 // pred_check_branch
    %726 = sbr.rel (0) target = $region41
  $region40: #{graph_contrastive_loss.3} parent=0 // pred_region
    _
  $region41: #{graph_contrastive_loss.3} parent=0 // pred_fallthru
    _

</llo_original>
